<compile_context>
chip_gen: v5e
topology: v5e:2x2
jax: 0.10.0
libtpu: 0.0.40
codegen_flags: <defaults>
</compile_context>

<pallas_src>
import functools

import jax
import jax.numpy as jnp
from jax.experimental import pallas as pl
from jax.experimental.pallas import tpu as pltpu


def _round_up(x, m):
    return ((x + m - 1) // m) * m


# ----------------------------------------------------------------------------
# Kernels
# ----------------------------------------------------------------------------
def ffn_kernel_resident(x_ref, w1_ref, b1_ref, w2_ref, b2_ref, o_ref):
    """Single ff-step path: full w1/w2 resident in VMEM, no accumulator."""
    h = jnp.dot(x_ref[...], w1_ref[...], preferred_element_type=jnp.float32)
    h = jnp.maximum(h + b1_ref[...], 0.0)
    # dropout (eval mode) == identity
    out = jnp.dot(h.astype(w2_ref.dtype), w2_ref[...],
                  preferred_element_type=jnp.float32)
    o_ref[...] = (out + b2_ref[...]).astype(o_ref.dtype)


def ffn_kernel_acc(x_ref, w1_ref, b1_ref, w2_ref, b2_ref, o_ref, acc_ref):
    """Streamed-weight path: d_ff reduction axis innermost, f32 accumulator."""
    ff = pl.program_id(1)

    @pl.when(ff == 0)
    def _init():
        acc_ref[...] = jnp.zeros_like(acc_ref)

    h = jnp.dot(x_ref[...], w1_ref[...], preferred_element_type=jnp.float32)
    h = jnp.maximum(h + b1_ref[...], 0.0)
    # dropout (eval mode) == identity
    acc_ref[...] += jnp.dot(h.astype(w2_ref.dtype), w2_ref[...],
                            preferred_element_type=jnp.float32)

    @pl.when(ff == pl.num_programs(1) - 1)
    def _finalize():
        o_ref[...] = (acc_ref[...] + b2_ref[...]).astype(o_ref.dtype)


# ----------------------------------------------------------------------------
# Tile / budget selection
# ----------------------------------------------------------------------------
def _vmem_budget_bytes():
    phys = 64 * 1024 * 1024  # conservative default: v7x per-TC VMEM
    try:
        info = pltpu.get_tpu_info()
        cap = getattr(info, "vmem_capacity_bytes", None)
        if cap:
            phys = int(cap)
    except Exception:
        pass
    # ~96 MiB on 128 MiB parts (v5e/v6e), ~48 MiB on 64 MiB parts (v7x).
    return min(110 * 1024 * 1024, int(0.75 * phys))


def _choose_tiles(n, d_model, d_ff, itemsize, budget):
    """Solve (tile_n, tile_ff) under an explicit VMEM byte budget.

    Budget model (double-buffered pipeline):
      x + out : 2 * 2 * tile_n * d_model * itemsize
      w1 + w2 : 2 * itemsize * 2 * d_model * tile_ff
      biases  : 2 * itemsize * (tile_ff + d_model)
      acc     : 4 * tile_n * d_model            (streamed-weight path only)
    """
    cap_n = 1024 if budget >= 90 * 1024 * 1024 else 512
    xo_per_row = 2 * 2 * d_model * itemsize

    def weight_bytes(tff):
        return 2 * itemsize * (2 * d_model * tff + tff + d_model)

    def pick_tile_n(row_bytes, rem):
        tn = int(rem // max(row_bytes, 1))
        tn = min(tn, cap_n)
        if tn >= n:
            # Whole problem fits in 1-2 token tiles; keep 2 tiles for large N
            # so the "parallel" token axis still feeds both v7x TensorCores.
            return _round_up(-(-n // 2), 256) if n >= 512 else max(8, _round_up(n, 8))
        if tn >= 256:
            return (tn // 256) * 256
        return max(8, (tn // 8) * 8)

    # Path A: fully resident weights -> single ff step, weights DMA'd once.
    if weight_bytes(d_ff) <= 0.7 * budget:
        rem = budget - weight_bytes(d_ff)
        return pick_tile_n(xo_per_row, rem), d_ff

    # Path B: stream weight slices along d_ff (reduction axis, innermost grid).
    tile_ff = None
    for m in range(d_ff, 127, -1):
        if d_ff % m == 0 and m % 128 == 0 and weight_bytes(m) <= 0.6 * budget:
            tile_ff = m
            break
    if tile_ff is None:
        tile_ff = 1024
        while tile_ff > 128 and weight_bytes(tile_ff) > 0.6 * budget:
            tile_ff //= 2
    rem = budget - weight_bytes(tile_ff)
    row_bytes = xo_per_row + 4 * d_model  # + f32 accumulator
    return pick_tile_n(row_bytes, rem), tile_ff


# ----------------------------------------------------------------------------
# Wrapper
# ----------------------------------------------------------------------------
@functools.partial(jax.jit, static_argnames=("tile_n", "tile_ff", "compute_dtype"))
def positionwise_ffn(x, w1, b1, w2, b2, *, tile_n=None, tile_ff=None,
                     compute_dtype=None):
    """out = relu(x @ w1 + b1) @ w2 + b2.

    x: (batch, seq, d_model); w1: (d_model, d_ff); w2: (d_ff, d_model)
    (weights stored (in, out), i.e. transposed vs. PyTorch nn.Linear).
    """
    batch, seq, d_model = x.shape
    d_ff = w1.shape[1]
    n = batch * seq
    out_dtype = x.dtype

    if compute_dtype is not None:
        x = x.astype(compute_dtype)
        w1 = w1.astype(compute_dtype)
        w2 = w2.astype(compute_dtype)

    itemsize = jnp.dtype(x.dtype).itemsize
    budget = _vmem_budget_bytes()
    auto_n, auto_ff = _choose_tiles(n, d_model, d_ff, itemsize, budget)
    tile_n = auto_n if tile_n is None else tile_n
    tile_ff = auto_ff if tile_ff is None else tile_ff

    x2d = x.reshape(n, d_model)

    # Only the d_ff (reduction) axis truly needs zero padding; the auto chooser
    # picks tile_ff from divisors of d_ff, so this copy is normally never made.
    ff_pad = _round_up(d_ff, tile_ff)
    if ff_pad != d_ff:
        w1 = jnp.pad(w1, ((0, 0), (0, ff_pad - d_ff)))
        b1 = jnp.pad(b1, ((0, ff_pad - d_ff),))
        w2 = jnp.pad(w2, ((0, ff_pad - d_ff), (0, 0)))

    b1_2d = b1.reshape(1, ff_pad)
    b2_2d = b2.reshape(1, d_model)

    n_tiles = -(-n // tile_n)        # ragged last token block -> masked writeback
    ff_tiles = ff_pad // tile_ff

    if ff_tiles == 1:
        # Resident-weight fast path: grid-constant weight index_maps, weights
        # DMA'd once; no accumulator / init / finalize phases.
        grid = (n_tiles,)
        kernel = ffn_kernel_resident
        in_specs = [
            pl.BlockSpec((tile_n, d_model), lambda i: (i, 0)),
            pl.BlockSpec((d_model, tile_ff), lambda i: (0, 0)),
            pl.BlockSpec((1, tile_ff), lambda i: (0, 0)),
            pl.BlockSpec((tile_ff, d_model), lambda i: (0, 0)),
            pl.BlockSpec((1, d_model), lambda i: (0, 0)),
        ]
        out_specs = pl.BlockSpec((tile_n, d_model), lambda i: (i, 0))
        scratch = []
        dims = ("parallel",)
    else:
        grid = (n_tiles, ff_tiles)
        kernel = ffn_kernel_acc
        in_specs = [
            pl.BlockSpec((tile_n, d_model), lambda i, j: (i, 0)),
            pl.BlockSpec((d_model, tile_ff), lambda i, j: (0, j)),
            pl.BlockSpec((1, tile_ff), lambda i, j: (0, j)),
            pl.BlockSpec((tile_ff, d_model), lambda i, j: (j, 0)),
            pl.BlockSpec((1, d_model), lambda i, j: (0, 0)),
        ]
        out_specs = pl.BlockSpec((tile_n, d_model), lambda i, j: (i, 0))
        scratch = [pltpu.VMEM((tile_n, d_model), jnp.float32)]
        dims = ("parallel", "arbitrary")

    out2d = pl.pallas_call(
        kernel,
        out_shape=jax.ShapeDtypeStruct((n, d_model), out_dtype),
        grid_spec=pltpu.PrefetchScalarGridSpec(
            num_scalar_prefetch=0,
            grid=grid,
            in_specs=in_specs,
            out_specs=out_specs,
            scratch_shapes=scratch,
        ),
        compiler_params=pltpu.CompilerParams(
            dimension_semantics=dims,
            vmem_limit_bytes=int(budget),
        ),
    )(x2d, w1, b1_2d, w2, b2_2d)

    return out2d.reshape(batch, seq, d_model)


def init_params(key, d_model, d_ff, dtype=jnp.float32):
    """Deterministic init mirroring nn.Linear's uniform(-1/sqrt(fan_in), +...)."""
    k1, k2, k3, k4 = jax.random.split(key, 4)
    bound1 = 1.0 / (d_model ** 0.5)
    bound2 = 1.0 / (d_ff ** 0.5)
    # stored as (in, out) == transpose of PyTorch's (out, in) weight
    w1 = jax.random.uniform(k1, (d_model, d_ff), dtype, -bound1, bound1)
    b1 = jax.random.uniform(k2, (d_ff,), dtype, -bound1, bound1)
    w2 = jax.random.uniform(k3, (d_ff, d_model), dtype, -bound2, bound2)
    b2 = jax.random.uniform(k4, (d_model,), dtype, -bound2, bound2)
    return w1, b1, w2, b2


if __name__ == "__main__":
    key = jax.random.PRNGKey(0)
    batch, seq, d_model, d_ff = 2, 8, 32, 64

    kx, kp = jax.random.split(key)
    x = jax.random.normal(kx, (batch, seq, d_model), jnp.float32)
    w1, b1, w2, b2 = init_params(kp, d_model, d_ff)

    ref = jnp.maximum(x @ w1 + b1, 0.0) @ w2 + b2

    # 1) auto tiling -> resident-weight single-ff-step path
    out = jax.block_until_ready(positionwise_ffn(x, w1, b1, w2, b2))
    assert out.shape == (batch, seq, d_model)
    assert jnp.allclose(out, ref, atol=1e-5, rtol=1e-5)

    # 2) forced small tiles -> multi token-tile + multi ff-step accumulator path
    out2 = jax.block_until_ready(
        positionwise_ffn(x, w1, b1, w2, b2, tile_n=8, tile_ff=32))
    assert jnp.allclose(out2, ref, atol=1e-5, rtol=1e-5)

    # 3) ragged token count (n not a multiple of tile_n) -> masked last block
    xr = x[:, :7, :]
    refr = jnp.maximum(xr @ w1 + b1, 0.0) @ w2 + b2
    out3 = jax.block_until_ready(positionwise_ffn(xr, w1, b1, w2, b2, tile_n=8))
    assert out3.shape == xr.shape
    assert jnp.allclose(out3, refr, atol=1e-5, rtol=1e-5)

    # 4) bf16 MXU-native compute path (f32 accumulation), loose tolerance
    out4 = jax.block_until_ready(
        positionwise_ffn(x, w1, b1, w2, b2, compute_dtype=jnp.bfloat16))
    assert jnp.allclose(out4, ref, atol=0.1, rtol=0.1)

    print("KERNEL_OK")
</pallas_src>

<mosaic_0001>
module attributes {stable_mosaic.version = 11 : i64} {
  func.func @ffn_kernel_resident(%arg0: i32, %arg1: memref<16x32xf32, #tpu.memory_space<vmem>>, %arg2: memref<32x64xf32, #tpu.memory_space<vmem>>, %arg3: memref<1x64xf32, #tpu.memory_space<vmem>>, %arg4: memref<64x32xf32, #tpu.memory_space<vmem>>, %arg5: memref<1x32xf32, #tpu.memory_space<vmem>>, %arg6: memref<16x32xf32, #tpu.memory_space<vmem>>) attributes {dimension_semantics = [#tpu.dimension_semantics<parallel>], iteration_bounds = array<i64: 1>, scalar_prefetch = 0 : i64, scratch_operands = 0 : i64, tpu.core_type = #tpu.core_type<tc>, window_params = [{transform_indices = @transform_0, window_bounds = array<i64: 16, 32>}, {pipeline_mode = #tpu.pipeline_mode<synchronous>, transform_indices = @transform_1, window_bounds = array<i64: 32, 64>}, {pipeline_mode = #tpu.pipeline_mode<synchronous>, transform_indices = @transform_2, window_bounds = array<i64: 1, 64>}, {pipeline_mode = #tpu.pipeline_mode<synchronous>, transform_indices = @transform_3, window_bounds = array<i64: 64, 32>}, {pipeline_mode = #tpu.pipeline_mode<synchronous>, transform_indices = @transform_4, window_bounds = array<i64: 1, 32>}, {transform_indices = @transform_5, window_bounds = array<i64: 16, 32>}]} {
    %c0 = arith.constant 0 : index
    %c0_0 = arith.constant 0 : index
    %0 = vector.load %arg1[%c0, %c0_0] : memref<16x32xf32, #tpu.memory_space<vmem>>, vector<16x32xf32>
    %c0_1 = arith.constant 0 : index
    %c0_2 = arith.constant 0 : index
    %1 = vector.load %arg2[%c0_1, %c0_2] : memref<32x64xf32, #tpu.memory_space<vmem>>, vector<32x64xf32>
    %cst = arith.constant dense<0.000000e+00> : vector<16x64xf32>
    %2 = tpu.matmul %0, %1, %cst {dimension_numbers = #tpu.dot_dimension_numbers<[1], [0], [0], [1], [0, 0, 1, 1], [], []>} : vector<16x32xf32>, vector<32x64xf32>, vector<16x64xf32> -> vector<16x64xf32>
    %c0_3 = arith.constant 0 : index
    %c0_4 = arith.constant 0 : index
    %3 = vector.load %arg3[%c0_3, %c0_4] : memref<1x64xf32, #tpu.memory_space<vmem>>, vector<1x64xf32>
    %4 = vector.broadcast %3 : vector<1x64xf32> to vector<16x64xf32>
    %5 = arith.addf %2, %4 : vector<16x64xf32>
    %cst_5 = arith.constant 0.000000e+00 : f32
    %6 = vector.broadcast %cst_5 : f32 to vector<16x64xf32>
    %7 = arith.maximumf %5, %6 : vector<16x64xf32>
    %c0_6 = arith.constant 0 : index
    %c0_7 = arith.constant 0 : index
    %8 = vector.load %arg4[%c0_6, %c0_7] : memref<64x32xf32, #tpu.memory_space<vmem>>, vector<64x32xf32>
    %cst_8 = arith.constant dense<0.000000e+00> : vector<16x32xf32>
    %9 = tpu.matmul %7, %8, %cst_8 {dimension_numbers = #tpu.dot_dimension_numbers<[1], [0], [0], [1], [0, 0, 1, 1], [], []>} : vector<16x64xf32>, vector<64x32xf32>, vector<16x32xf32> -> vector<16x32xf32>
    %c0_9 = arith.constant 0 : index
    %c0_10 = arith.constant 0 : index
    %10 = vector.load %arg5[%c0_9, %c0_10] : memref<1x32xf32, #tpu.memory_space<vmem>>, vector<1x32xf32>
    %11 = vector.broadcast %10 : vector<1x32xf32> to vector<16x32xf32>
    %12 = arith.addf %9, %11 : vector<16x32xf32>
    %c0_11 = arith.constant 0 : index
    %c0_12 = arith.constant 0 : index
    %13 = vector.load %arg6[%c0_11, %c0_12] : memref<16x32xf32, #tpu.memory_space<vmem>>, vector<16x32xf32>
    tpu.vector_store %arg6[%c0_11, %c0_12], %12 {strides = array<i32>} : memref<16x32xf32, #tpu.memory_space<vmem>>, vector<16x32xf32>,
    return
  }
  func.func @transform_0(%arg0: i32) -> (i32, i32) {
    %c0_i32 = arith.constant 0 : i32
    %c0_i32_0 = arith.constant 0 : i32
    return %arg0, %c0_i32 : i32, i32
  }
  func.func @transform_1(%arg0: i32) -> (i32, i32) {
    %c0_i32 = arith.constant 0 : i32
    %c0_i32_0 = arith.constant 0 : i32
    %c0_i32_1 = arith.constant 0 : i32
    return %c0_i32, %c0_i32_0 : i32, i32
  }
  func.func @transform_2(%arg0: i32) -> (i32, i32) {
    %c0_i32 = arith.constant 0 : i32
    %c0_i32_0 = arith.constant 0 : i32
    %c0_i32_1 = arith.constant 0 : i32
    return %c0_i32, %c0_i32_0 : i32, i32
  }
  func.func @transform_3(%arg0: i32) -> (i32, i32) {
    %c0_i32 = arith.constant 0 : i32
    %c0_i32_0 = arith.constant 0 : i32
    %c0_i32_1 = arith.constant 0 : i32
    return %c0_i32, %c0_i32_0 : i32, i32
  }
  func.func @transform_4(%arg0: i32) -> (i32, i32) {
    %c0_i32 = arith.constant 0 : i32
    %c0_i32_0 = arith.constant 0 : i32
    %c0_i32_1 = arith.constant 0 : i32
    return %c0_i32, %c0_i32_0 : i32, i32
  }
  func.func @transform_5(%arg0: i32) -> (i32, i32) {
    %c0_i32 = arith.constant 0 : i32
    %c0_i32_0 = arith.constant 0 : i32
    return %arg0, %c0_i32 : i32, i32
  }
}

</mosaic_0001>

<llo_original>
// kernel: positionwise_ffn.1
$region0: #{positionwise_ffn.1}
  #allocation0 [shape = 'u32[]', space=smem, size = 0x4, offset = 0x4, fixed_abs, tag = 'smem constant byte address 0x4 - core index']
  #allocation1 [shape = 'u32[72,128]{1,0:T(1,128)}', space=vmem, size = 0x9000, scoped, tag = 'internal scratch']
  %s0 = inlined_call_operand.vmem [shape: f32[16,32], index: 0, kind: input, shape index: {}]
  %s1 = inlined_call_operand.vmem [shape: f32[32,64], index: 1, kind: input, shape index: {}]
  %s2 = inlined_call_operand.vmem [shape: f32[1,64], index: 2, kind: input, shape index: {}]
  %s3 = inlined_call_operand.vmem [shape: f32[64,32], index: 3, kind: input, shape index: {}]
  %s4 = inlined_call_operand.vmem [shape: f32[1,32], index: 4, kind: input, shape index: {}]
  %s5 = inlined_call_operand.hbm [shape: f32[16,32], index: 5, kind: output, shape index: {}]
  %s6 = sld [smem:[#allocation0]]
  $region30: #{positionwise_ffn.1} parent=0
    _
  %s8 = ssub.s32 1, %s6
  %s9 = scalar_select 0, %s8, %s6
  $region1: #{positionwise_ffn.1} parent=0
    #allocation2 [shape = 'u8[8192]{0}', space=vmem, size = 0x2000, scoped, tag = 'output window, operand 0, single buffered']
    #allocation3 [shape = 's32[1]{0}', space=sflag, size = 0x4, scoped, tag = 'scoped memory for positionwise_ffn.1']
    %10 = vsyncpa [#allocation3], 0
    // Predicated region
    $region2: #{positionwise_ffn.1} parent=1 // pred_check
      _
    $region3: #{positionwise_ffn.1} parent=1 // pred_check_branch
      %12 = sbr.rel (0) target = $region5
    $region4: #{positionwise_ffn.1} parent=1 // pred_region
      _
    $region5: #{positionwise_ffn.1} parent=1 // pred_fallthru
      _
    // Predicated region
    $region6: #{positionwise_ffn.1} parent=1 // pred_check
      _
    $region7: #{positionwise_ffn.1} parent=1 // pred_check_branch
      %14 = sbr.rel (0) target = $region9
    $region8: #{positionwise_ffn.1} parent=1 // pred_region
      _
    $region9: #{positionwise_ffn.1} parent=1 // pred_fallthru
      _
    // Predicated region
    $region10: #{positionwise_ffn.1} parent=1 // pred_check
      _
    $region11: #{positionwise_ffn.1} parent=1 // pred_check_branch
      %16 = sbr.rel (0) target = $region13
    $region12: #{positionwise_ffn.1} parent=1 // pred_region
      _
    $region13: #{positionwise_ffn.1} parent=1 // pred_fallthru
      _
    // Predicated region
    $region14: #{positionwise_ffn.1} parent=1 // pred_check
      _
    $region15: #{positionwise_ffn.1} parent=1 // pred_check_branch
      %18 = sbr.rel (0) target = $region17
    $region16: #{positionwise_ffn.1} parent=1 // pred_region
      _
    $region17: #{positionwise_ffn.1} parent=1 // pred_fallthru
      _
    // Predicated region
    $region18: #{positionwise_ffn.1} parent=1 // pred_check
      _
    $region19: #{positionwise_ffn.1} parent=1 // pred_check_branch
      %20 = sbr.rel (0) target = $region21
    $region20: #{positionwise_ffn.1} parent=1 // pred_region
      _
    $region21: #{positionwise_ffn.1} parent=1 // pred_fallthru
      _
    %v21 = vld [vmem:[%s0] sm:$0xff]
    %v22 = vld [vmem:[%s0 + $0x8] sm:$0xff]
    %v23 = vld [vmem:[%s1] sm:$0xff]
    %v24 = vld [vmem:[%s1 + $0x8] sm:$0xff]
    %v25 = vld [vmem:[%s1 + $0x10] sm:$0xff]
    %v26 = vld [vmem:[%s1 + $0x18] sm:$0xff]
    %v27 = vld [vmem:[%s2] sm:$0x1]
    %v29 = vperm.slane %v27, 0
    %vm31 = vcmask 261120
    %v33 = vsel %vm31, %v21, 0
    %v36 = vsel %vm31, %v22, 0
    %38 = vmatpush.msra.mxu0 0.0
    %39 = vmatpush.msra.mxu0 0.0
    %40 = vmatpush.msra.mxu0 0.0
    %41 = vmatpush.msra.mxu0 0.0
    %42 = vmatpush.msra.mxu0 0.0
    %43 = vmatpush.msra.mxu0 0.0
    %44 = vmatpush.msra.mxu0 0.0
    %45 = vmatpush.msra.mxu0 0.0
    %46 = vmatpush.msra.mxu0 0.0
    %47 = vmatpush.msra.mxu0 0.0
    %48 = vmatpush.msra.mxu0 0.0
    %49 = vmatpush.msra.mxu0 0.0
    %50 = vmatpush.msra.mxu0 %v26
    %51 = vmatpush.msra.mxu0 %v25
    %52 = vmatpush.msra.mxu0 %v24
    %53 = vmatpush.msra.mxu0 %v23
    %54 = vmatmul.f32.gmra.mxu0 %v33
    %v55 = vpop.f32.mrf.mxu0
    %v56 = vadd.f32 %v29, %v55
    %57 = vmatmul.f32.gmra.mxu0 %v36
    %v58 = vpop.f32.mrf.mxu0
    %v59 = vadd.f32 %v29, %v58
    %60 = vdwg.mxu0
    %v61 = vmax.f32 %v56, 0.0
    %v62 = vmax.f32 %v59, 0.0
    %v63 = vld [vmem:[%s3] sm:$0xff]
    %v64 = vld [vmem:[%s3 + $0x8] sm:$0xff]
    %v65 = vld [vmem:[%s3 + $0x10] sm:$0xff]
    %v66 = vld [vmem:[%s3 + $0x18] sm:$0xff]
    %v67 = vld [vmem:[%s3 + $0x20] sm:$0xff]
    %v68 = vld [vmem:[%s3 + $0x28] sm:$0xff]
    %v69 = vld [vmem:[%s3 + $0x30] sm:$0xff]
    %v70 = vld [vmem:[%s3 + $0x38] sm:$0xff]
    %v71 = vld [vmem:[%s4] sm:$0x1]
    %v73 = vperm.slane %v71, 0
    %vm75 = vcmask 523264
    %v77 = vsel %vm75, %v61, 0
    %v80 = vsel %vm75, %v62, 0
    %82 = vmatpush.msra.mxu0 0.0
    %83 = vmatpush.msra.mxu0 0.0
    %84 = vmatpush.msra.mxu0 0.0
    %85 = vmatpush.msra.mxu0 0.0
    %86 = vmatpush.msra.mxu0 0.0
    %87 = vmatpush.msra.mxu0 0.0
    %88 = vmatpush.msra.mxu0 0.0
    %89 = vmatpush.msra.mxu0 0.0
    %90 = vmatpush.msra.mxu0 %v70
    %91 = vmatpush.msra.mxu0 %v69
    %92 = vmatpush.msra.mxu0 %v68
    %93 = vmatpush.msra.mxu0 %v67
    %94 = vmatpush.msra.mxu0 %v66
    %95 = vmatpush.msra.mxu0 %v65
    %96 = vmatpush.msra.mxu0 %v64
    %97 = vmatpush.msra.mxu0 %v63
    %98 = vmatmul.f32.gmra.mxu0 %v77
    %v99 = vpop.f32.mrf.mxu0
    %v100 = vadd.f32 %v73, %v99
    %101 = vmatmul.f32.gmra.mxu0 %v80
    %v102 = vpop.f32.mrf.mxu0
    %v103 = vadd.f32 %v73, %v102
    %104 = vdwg.mxu0
    %105 = vst.msk [vmem:[#allocation2] sm:$0xff] %vm31, %v100
    %106 = vst.msk [vmem:[#allocation2 + $0x8] sm:$0xff] %vm31, %v103
    // Predicated region
    $region22: #{positionwise_ffn.1} parent=1 // pred_check
      _
    $region23: #{positionwise_ffn.1} parent=1 // pred_check_branch
      %108 = sbr.rel (0) target = $region25
    $region24: #{positionwise_ffn.1} parent=1 // pred_region
      %110 = vsyncadd [#allocation3], 0
      %s111 = sshll.u32 [#allocation2], 4
      %s112 = int_to_ptr.vmem [resolvable:$true] %s111
      %s113 = sshll.u32 %s5, 4
      %s114 = int_to_ptr.hbm [resolvable:$true] %s113
      %119 = dma.vmem_to_hbm [thread:$0]  %s112, 256, %s114, [#allocation3], 128, 128, 8
    $region25: #{positionwise_ffn.1} parent=1 // pred_fallthru
      _
    // Predicated region
    $region26: #{positionwise_ffn.1} parent=1 // pred_check
      _
    $region27: #{positionwise_ffn.1} parent=1 // pred_check_branch
      %121 = sbr.rel (0) target = $region29
    $region28: #{positionwise_ffn.1} parent=1 // pred_region
      %123 = dma.done [#allocation3], 256
    $region29: #{positionwise_ffn.1} parent=1 // pred_fallthru
      _
    %124 = vsyncpa [#allocation3], 1

</llo_original>
